<compile_context>
chip_gen: v7x
topology: tpu7x:2x2x1
jax: 0.10.0
libtpu: 0.0.40
codegen_flags: <defaults>
</compile_context>

<pallas_src>
import functools

import jax
import jax.numpy as jnp
from jax.experimental import pallas as pl
from jax.experimental.pallas import tpu as pltpu


def _round_up(x, m):
    return (x + m - 1) // m * m


def _rcml_kernel(x_ref, w1_ref, w2_ref, ev_ref, eva_ref, *, V, C):
    """x_ref:(Bp,K1) w1_ref:(K1,N1) w2_ref:(N1,N2) ev_ref:(Bp,N2) eva_ref:(Bp,C)."""
    # Layer 1 for all views at once (bias fused via the ones lane) + ReLU.
    h = jnp.maximum(
        jnp.dot(x_ref[...], w1_ref[...], preferred_element_type=jnp.float32), 0.0)
    # Layer 2 (bias fused via the ReLU-preserved ones column) + Softplus.
    z = jnp.dot(h, w2_ref[...], preferred_element_type=jnp.float32)
    # PyTorch Softplus(beta=1, threshold=20).  log(1+exp(.)) instead of log1p to
    # stay on ops Mosaic lowers natively; difference is < 1e-7 at these values.
    ev = jnp.where(z > 20.0, z, jnp.log(1.0 + jnp.exp(jnp.minimum(z, 20.0))))
    ev_ref[...] = ev  # single lane-dense (8,128) unmasked store

    # Recursive average, exact PyTorch reduction order:
    #   a = e_0 ; for v in 1..V-1: a = (e_v + a) / 2
    a = ev[:, 0:C]
    for v in range(1, V):
        a = (ev[:, v * C:(v + 1) * C] + a) * 0.5
    eva_ref[...] = a


@jax.jit
def rcml_forward(X, W1, b1, W2, b2):
    """X:(V,B,D), W1:(V,D,H), b1:(V,1,H), W2:(V,H,C), b2:(V,1,C).

    Weights use the pre-transposed (in, out) layout; a real integration must
    transpose PyTorch nn.Linear's (out, in) weights in the wrapper.
    Returns (evidences stacked as (V,B,C), evidence_a of shape (B,C)).
    """
    V, B, D = X.shape
    H = W1.shape[2]
    C = W2.shape[2]

    SUB, LANE = 8, 128
    Bp = _round_up(B, SUB)
    K1 = _round_up(V * D + 1, LANE)   # packed input lanes (+ ones lane)
    N1 = _round_up(V * H + 1, LANE)   # packed hidden lanes (+ ones column)
    N2 = _round_up(V * C, LANE)       # packed evidence lanes
    ones_x = V * D                    # index of the ones lane in Xp
    ones_h = V * H                    # index of the ones column in h

    # ---- wrapper-side packing (layout plumbing only, fused into the jit) ----
    Xp = jnp.zeros((Bp, K1), jnp.float32)
    for v in range(V):
        Xp = Xp.at[:B, v * D:(v + 1) * D].set(X[v])
    Xp = Xp.at[:B, ones_x].set(1.0)

    W1a = jnp.zeros((K1, N1), jnp.float32)
    for v in range(V):
        W1a = W1a.at[v * D:(v + 1) * D, v * H:(v + 1) * H].set(W1[v])
        W1a = W1a.at[ones_x, v * H:(v + 1) * H].set(b1[v, 0])
    W1a = W1a.at[ones_x, ones_h].set(1.0)   # ReLU(1)=1 -> feeds layer-2 bias row

    W2a = jnp.zeros((N1, N2), jnp.float32)
    for v in range(V):
        W2a = W2a.at[v * H:(v + 1) * H, v * C:(v + 1) * C].set(W2[v])
        W2a = W2a.at[ones_h, v * C:(v + 1) * C].set(b2[v, 0])

    kernel = functools.partial(_rcml_kernel, V=V, C=C)
    vmem = pl.BlockSpec(memory_space=pltpu.MemorySpace.VMEM)
    ev_packed, eva = pl.pallas_call(
        kernel,
        out_shape=(
            jax.ShapeDtypeStruct((Bp, N2), jnp.float32),
            jax.ShapeDtypeStruct((Bp, C), jnp.float32),
        ),
        in_specs=[vmem, vmem, vmem],
        out_specs=(vmem, vmem),
        cost_estimate=pl.CostEstimate(
            flops=2 * Bp * (K1 * N1 + N1 * N2),
            transcendentals=2 * Bp * N2,
            bytes_accessed=4 * (Bp * K1 + K1 * N1 + N1 * N2 + Bp * N2 + Bp * C),
        ),
        # No grid: everything fits comfortably in VMEM for one invocation.
    )(Xp, W1a, W2a)

    # Unpack lanes back to (V, B, C) — cheap wrapper-side layout plumbing.
    evidences = ev_packed[:B, :V * C].reshape(B, V, C).transpose(1, 0, 2)
    return evidences, eva[:B]


def _reference(X, W1, b1, W2, b2):
    """Pure-JAX reference of the PyTorch forward (eval mode)."""
    V = X.shape[0]
    hi = jax.lax.Precision.HIGHEST
    evs = []
    for v in range(V):
        h = jnp.maximum(jnp.dot(X[v], W1[v], precision=hi) + b1[v], 0.0)
        z = jnp.dot(h, W2[v], precision=hi) + b2[v]
        e = jnp.where(z > 20.0, z, jnp.log(1.0 + jnp.exp(jnp.minimum(z, 20.0))))
        evs.append(e)
    a = evs[0]
    for v in range(1, V):
        a = (evs[v] + a) / 2
    return jnp.stack(evs), a


if __name__ == "__main__":
    # Small, deterministic config: 3 views, each EvidenceCollector has
    # dims[v] = [32, 64] and num_classes = 8.  Batch = 4.
    V, B, D, H, C = 3, 4, 32, 64, 8

    key = jax.random.PRNGKey(0)
    kx, kw1, kb1, kw2, kb2 = jax.random.split(key, 5)

    X = jax.random.normal(kx, (V, B, D), dtype=jnp.float32)
    # Deterministic synthetic parameters (shapes match nn.Linear weights^T).
    W1 = jax.random.normal(kw1, (V, D, H), dtype=jnp.float32) * 0.1
    b1 = jax.random.normal(kb1, (V, 1, H), dtype=jnp.float32) * 0.1
    W2 = jax.random.normal(kw2, (V, H, C), dtype=jnp.float32) * 0.1
    b2 = jax.random.normal(kb2, (V, 1, C), dtype=jnp.float32) * 0.1

    evidences_stacked, evidence_a = rcml_forward(X, W1, b1, W2, b2)
    jax.block_until_ready((evidences_stacked, evidence_a))

    # RCML returns (dict of per-view evidences, aggregated evidence).
    evidences = {v: evidences_stacked[v] for v in range(V)}

    ref_ev, ref_a = _reference(X, W1, b1, W2, b2)
    assert evidences_stacked.shape == (V, B, C)
    assert evidence_a.shape == (B, C)
    # Tolerance accounts for MXU f32-emulation vs XLA matmul rounding differences.
    assert jnp.allclose(evidences_stacked, ref_ev, atol=1e-4, rtol=1e-4)
    assert jnp.allclose(evidence_a, ref_a, atol=1e-4, rtol=1e-4)

    print("KERNEL_OK")
</pallas_src>

<mosaic_0001>
module attributes {stable_mosaic.version = 11 : i64} {
  func.func @_rcml_kernel(%arg0: memref<8x128xf32, #tpu.memory_space<vmem>>, %arg1: memref<128x256xf32, #tpu.memory_space<vmem>>, %arg2: memref<256x128xf32, #tpu.memory_space<vmem>>, %arg3: memref<8x128xf32, #tpu.memory_space<vmem>>, %arg4: memref<8x8xf32, #tpu.memory_space<vmem>>) attributes {dimension_semantics = [], scalar_prefetch = 0 : i64, scratch_operands = 0 : i64, tpu.core_type = #tpu.core_type<tc>} {
    %c0 = arith.constant 0 : index
    %c0_0 = arith.constant 0 : index
    %0 = vector.load %arg0[%c0, %c0_0] : memref<8x128xf32, #tpu.memory_space<vmem>>, vector<8x128xf32>
    %c0_1 = arith.constant 0 : index
    %c0_2 = arith.constant 0 : index
    %1 = vector.load %arg1[%c0_1, %c0_2] : memref<128x256xf32, #tpu.memory_space<vmem>>, vector<128x256xf32>
    %cst = arith.constant dense<0.000000e+00> : vector<8x256xf32>
    %2 = tpu.matmul %0, %1, %cst {dimension_numbers = #tpu.dot_dimension_numbers<[1], [0], [0], [1], [0, 0, 1, 1], [], []>} : vector<8x128xf32>, vector<128x256xf32>, vector<8x256xf32> -> vector<8x256xf32>
    %cst_3 = arith.constant 0.000000e+00 : f32
    %3 = vector.broadcast %cst_3 : f32 to vector<8x256xf32>
    %4 = arith.maximumf %2, %3 : vector<8x256xf32>
    %c0_4 = arith.constant 0 : index
    %c0_5 = arith.constant 0 : index
    %5 = vector.load %arg2[%c0_4, %c0_5] : memref<256x128xf32, #tpu.memory_space<vmem>>, vector<256x128xf32>
    %cst_6 = arith.constant dense<0.000000e+00> : vector<8x128xf32>
    %6 = tpu.matmul %4, %5, %cst_6 {dimension_numbers = #tpu.dot_dimension_numbers<[1], [0], [0], [1], [0, 0, 1, 1], [], []>} : vector<8x256xf32>, vector<256x128xf32>, vector<8x128xf32> -> vector<8x128xf32>
    %cst_7 = arith.constant 2.000000e+01 : f32
    %7 = vector.broadcast %cst_7 : f32 to vector<8x128xf32>
    %8 = arith.cmpf ogt, %6, %7 : vector<8x128xf32>
    %cst_8 = arith.constant 2.000000e+01 : f32
    %9 = vector.broadcast %cst_8 : f32 to vector<8x128xf32>
    %10 = arith.minimumf %6, %9 : vector<8x128xf32>
    %11 = math.exp %10 : vector<8x128xf32>
    %cst_9 = arith.constant 1.000000e+00 : f32
    %12 = vector.broadcast %cst_9 : f32 to vector<8x128xf32>
    %13 = arith.addf %12, %11 : vector<8x128xf32>
    %14 = math.log %13 : vector<8x128xf32>
    %15 = arith.select %8, %6, %14 : vector<8x128xi1>, vector<8x128xf32>
    %c0_10 = arith.constant 0 : index
    %c0_11 = arith.constant 0 : index
    %16 = vector.load %arg3[%c0_10, %c0_11] : memref<8x128xf32, #tpu.memory_space<vmem>>, vector<8x128xf32>
    tpu.vector_store %arg3[%c0_10, %c0_11], %15 {strides = array<i32>} : memref<8x128xf32, #tpu.memory_space<vmem>>, vector<8x128xf32>,
    %17 = vector.extract_strided_slice %15 {offsets = [0, 0], sizes = [8, 8], strides = [1, 1]} : vector<8x128xf32> to vector<8x8xf32>
    %18 = vector.extract_strided_slice %15 {offsets = [0, 8], sizes = [8, 8], strides = [1, 1]} : vector<8x128xf32> to vector<8x8xf32>
    %19 = arith.addf %18, %17 : vector<8x8xf32>
    %cst_12 = arith.constant 5.000000e-01 : f32
    %20 = vector.broadcast %cst_12 : f32 to vector<8x8xf32>
    %21 = arith.mulf %19, %20 : vector<8x8xf32>
    %22 = vector.extract_strided_slice %15 {offsets = [0, 16], sizes = [8, 8], strides = [1, 1]} : vector<8x128xf32> to vector<8x8xf32>
    %23 = arith.addf %22, %21 : vector<8x8xf32>
    %cst_13 = arith.constant 5.000000e-01 : f32
    %24 = vector.broadcast %cst_13 : f32 to vector<8x8xf32>
    %25 = arith.mulf %23, %24 : vector<8x8xf32>
    %c0_14 = arith.constant 0 : index
    %c0_15 = arith.constant 0 : index
    %26 = vector.load %arg4[%c0_14, %c0_15] : memref<8x8xf32, #tpu.memory_space<vmem>>, vector<8x8xf32>
    tpu.vector_store %arg4[%c0_14, %c0_15], %25 {strides = array<i32>} : memref<8x8xf32, #tpu.memory_space<vmem>>, vector<8x8xf32>,
    return
  }
}

</mosaic_0001>

<llo_original>
// kernel: rcml_forward.1
$region0: #{rcml_forward.1}
  #allocation0 [shape = 'u32[]', space=smem, size = 0x4, offset = 0x4, fixed_abs, tag = 'smem constant byte address 0x4 - core index']
  #allocation1 [shape = 'u32[144,128]{1,0:T(1,128)}', space=vmem, size = 0x12000, scoped, tag = 'internal scratch']
  %s0 = inlined_call_operand.vmem [shape: f32[8,128], index: 0, kind: input, shape index: {}]
  %s1 = inlined_call_operand.vmem [shape: f32[128,256], index: 1, kind: input, shape index: {}]
  %s2 = inlined_call_operand.vmem [shape: f32[256,128], index: 2, kind: input, shape index: {}]
  %s3 = inlined_call_operand.vmem [shape: f32[8,128], index: 3, kind: output, shape index: {0}]
  %s4 = inlined_call_operand.vmem [shape: f32[8,8], index: 4, kind: output, shape index: {1}]
  %5 = xla_tuple %s3, %s4
  %s6 = sld [smem:[#allocation0]]
  $region30: #{rcml_forward.1} parent=0
    _
  %s8 = ssub.s32 1, %s6
  %s9 = scalar_select 0, %s8, %s6
  // Predicated region
  $region2: #{rcml_forward.1} parent=0 // pred_check
    _
  $region3: #{rcml_forward.1} parent=0 // pred_check_branch
    %11 = sbr.rel (0) target = $region5
  $region4: #{rcml_forward.1} parent=0 // pred_region
    _
  $region5: #{rcml_forward.1} parent=0 // pred_fallthru
    _
  // Predicated region
  $region6: #{rcml_forward.1} parent=0 // pred_check
    _
  $region7: #{rcml_forward.1} parent=0 // pred_check_branch
    %13 = sbr.rel (0) target = $region9
  $region8: #{rcml_forward.1} parent=0 // pred_region
    _
  $region9: #{rcml_forward.1} parent=0 // pred_fallthru
    _
  // Predicated region
  $region10: #{rcml_forward.1} parent=0 // pred_check
    _
  $region11: #{rcml_forward.1} parent=0 // pred_check_branch
    %15 = sbr.rel (0) target = $region13
  $region12: #{rcml_forward.1} parent=0 // pred_region
    _
  $region13: #{rcml_forward.1} parent=0 // pred_fallthru
    _
  %v16 = vld [vmem:[%s0] sm:$0xff]
  %v17 = vld [vmem:[%s1] sm:$0xff]
  %v18 = vld [vmem:[%s1 + $0x8] sm:$0xff]
  %v19 = vld [vmem:[%s1 + $0x10] sm:$0xff]
  %v20 = vld [vmem:[%s1 + $0x18] sm:$0xff]
  %v21 = vld [vmem:[%s1 + $0x20] sm:$0xff]
  %v22 = vld [vmem:[%s1 + $0x28] sm:$0xff]
  %v23 = vld [vmem:[%s1 + $0x30] sm:$0xff]
  %v24 = vld [vmem:[%s1 + $0x38] sm:$0xff]
  %v25 = vld [vmem:[%s1 + $0x40] sm:$0xff]
  %v26 = vld [vmem:[%s1 + $0x48] sm:$0xff]
  %v27 = vld [vmem:[%s1 + $0x50] sm:$0xff]
  %v28 = vld [vmem:[%s1 + $0x58] sm:$0xff]
  %v29 = vld [vmem:[%s1 + $0x60] sm:$0xff]
  %v30 = vld [vmem:[%s1 + $0x68] sm:$0xff]
  %v31 = vld [vmem:[%s1 + $0x70] sm:$0xff]
  %v32 = vld [vmem:[%s1 + $0x78] sm:$0xff]
  %v33 = vld [vmem:[%s1 + $0x80] sm:$0xff]
  %v34 = vld [vmem:[%s1 + $0x88] sm:$0xff]
  %v35 = vld [vmem:[%s1 + $0x90] sm:$0xff]
  %v36 = vld [vmem:[%s1 + $0x98] sm:$0xff]
  %v37 = vld [vmem:[%s1 + $0xa0] sm:$0xff]
  %v38 = vld [vmem:[%s1 + $0xa8] sm:$0xff]
  %v39 = vld [vmem:[%s1 + $0xb0] sm:$0xff]
  %v40 = vld [vmem:[%s1 + $0xb8] sm:$0xff]
  %v41 = vld [vmem:[%s1 + $0xc0] sm:$0xff]
  %v42 = vld [vmem:[%s1 + $0xc8] sm:$0xff]
  %v43 = vld [vmem:[%s1 + $0xd0] sm:$0xff]
  %v44 = vld [vmem:[%s1 + $0xd8] sm:$0xff]
  %v45 = vld [vmem:[%s1 + $0xe0] sm:$0xff]
  %v46 = vld [vmem:[%s1 + $0xe8] sm:$0xff]
  %v47 = vld [vmem:[%s1 + $0xf0] sm:$0xff]
  %v48 = vld [vmem:[%s1 + $0xf8] sm:$0xff]
  %49 = vmatprep.subr.mxu0 %v18
  %50 = vmatpush1.msra.mxu0 %v17
  %51 = vmatprep.subr.mxu0 %v20
  %52 = vmatpush1.msra.mxu0 %v19
  %53 = vmatprep.subr.mxu0 %v22
  %54 = vmatpush1.msra.mxu0 %v21
  %55 = vmatprep.subr.mxu0 %v24
  %56 = vmatpush1.msra.mxu0 %v23
  %57 = vmatprep.subr.mxu0 %v26
  %58 = vmatpush1.msra.mxu0 %v25
  %59 = vmatprep.subr.mxu0 %v28
  %60 = vmatpush1.msra.mxu0 %v27
  %61 = vmatprep.subr.mxu0 %v30
  %62 = vmatpush1.msra.mxu0 %v29
  %63 = vmatprep.subr.mxu0 %v32
  %64 = vmatpush1.msra.mxu0 %v31
  %65 = vmatprep.subr.mxu0 %v34
  %66 = vmatpush1.msra.mxu0 %v33
  %67 = vmatprep.subr.mxu0 %v36
  %68 = vmatpush1.msra.mxu0 %v35
  %69 = vmatprep.subr.mxu0 %v38
  %70 = vmatpush1.msra.mxu0 %v37
  %71 = vmatprep.subr.mxu0 %v40
  %72 = vmatpush1.msra.mxu0 %v39
  %73 = vmatprep.subr.mxu0 %v42
  %74 = vmatpush1.msra.mxu0 %v41
  %75 = vmatprep.subr.mxu0 %v44
  %76 = vmatpush1.msra.mxu0 %v43
  %77 = vmatprep.subr.mxu0 %v46
  %78 = vmatpush1.msra.mxu0 %v45
  %79 = vmatprep.subr.mxu0 %v48
  %80 = vmatpush1.msra.mxu0 %v47
  %81 = vmatprep.subr.mxu0 0.0
  %82 = vmatpush1.msra.mxu0 0.0
  %83 = vmatprep.subr.mxu0 0.0
  %84 = vmatpush1.msra.mxu0 0.0
  %85 = vmatprep.subr.mxu0 0.0
  %86 = vmatpush1.msra.mxu0 0.0
  %87 = vmatprep.subr.mxu0 0.0
  %88 = vmatpush1.msra.mxu0 0.0
  %89 = vmatprep.subr.mxu0 0.0
  %90 = vmatpush1.msra.mxu0 0.0
  %91 = vmatprep.subr.mxu0 0.0
  %92 = vmatpush1.msra.mxu0 0.0
  %93 = vmatprep.subr.mxu0 0.0
  %94 = vmatpush1.msra.mxu0 0.0
  %95 = vmatprep.subr.mxu0 0.0
  %96 = vmatpush1.msra.mxu0 0.0
  %97 = vmatprep.subr.mxu0 0.0
  %98 = vmatpush1.msra.mxu0 0.0
  %99 = vmatprep.subr.mxu0 0.0
  %100 = vmatpush1.msra.mxu0 0.0
  %101 = vmatprep.subr.mxu0 0.0
  %102 = vmatpush1.msra.mxu0 0.0
  %103 = vmatprep.subr.mxu0 0.0
  %104 = vmatpush1.msra.mxu0 0.0
  %105 = vmatprep.subr.mxu0 0.0
  %106 = vmatpush1.msra.mxu0 0.0
  %107 = vmatprep.subr.mxu0 0.0
  %108 = vmatpush1.msra.mxu0 0.0
  %109 = vmatprep.subr.mxu0 0.0
  %110 = vmatpush1.msra.mxu0 0.0
  %111 = vmatprep.subr.mxu0 0.0
  %112 = vmatpush1.msra.mxu0 0.0
  %113 = vmatprep.mubr.f32.mxu0 0.0
  %114 = vmatmul.mubr.f32.gmra.mrb[0].mxu0 %v16
  %v115 = vpop.f32.mrb[0].mxu0
  %v116 = vadd.f32 0.0, %v115
  %v117 = vpop.f32.mrb[0].mxu0
  %v118 = vadd.f32 0.0, %v117
  %119 = vdwg.mxu0
  %v120 = vmax.f32 %v116, 0.0
  %v121 = vmax.f32 %v118, 0.0
  %v122 = vld [vmem:[%s2] sm:$0xff]
  %v123 = vld [vmem:[%s2 + $0x8] sm:$0xff]
  %v124 = vld [vmem:[%s2 + $0x10] sm:$0xff]
  %v125 = vld [vmem:[%s2 + $0x18] sm:$0xff]
  %v126 = vld [vmem:[%s2 + $0x20] sm:$0xff]
  %v127 = vld [vmem:[%s2 + $0x28] sm:$0xff]
  %v128 = vld [vmem:[%s2 + $0x30] sm:$0xff]
  %v129 = vld [vmem:[%s2 + $0x38] sm:$0xff]
  %v130 = vld [vmem:[%s2 + $0x40] sm:$0xff]
  %v131 = vld [vmem:[%s2 + $0x48] sm:$0xff]
  %v132 = vld [vmem:[%s2 + $0x50] sm:$0xff]
  %v133 = vld [vmem:[%s2 + $0x58] sm:$0xff]
  %v134 = vld [vmem:[%s2 + $0x60] sm:$0xff]
  %v135 = vld [vmem:[%s2 + $0x68] sm:$0xff]
  %v136 = vld [vmem:[%s2 + $0x70] sm:$0xff]
  %v137 = vld [vmem:[%s2 + $0x78] sm:$0xff]
  %v138 = vld [vmem:[%s2 + $0x80] sm:$0xff]
  %v139 = vld [vmem:[%s2 + $0x88] sm:$0xff]
  %v140 = vld [vmem:[%s2 + $0x90] sm:$0xff]
  %v141 = vld [vmem:[%s2 + $0x98] sm:$0xff]
  %v142 = vld [vmem:[%s2 + $0xa0] sm:$0xff]
  %v143 = vld [vmem:[%s2 + $0xa8] sm:$0xff]
  %v144 = vld [vmem:[%s2 + $0xb0] sm:$0xff]
  %v145 = vld [vmem:[%s2 + $0xb8] sm:$0xff]
  %v146 = vld [vmem:[%s2 + $0xc0] sm:$0xff]
  %v147 = vld [vmem:[%s2 + $0xc8] sm:$0xff]
  %v148 = vld [vmem:[%s2 + $0xd0] sm:$0xff]
  %v149 = vld [vmem:[%s2 + $0xd8] sm:$0xff]
  %v150 = vld [vmem:[%s2 + $0xe0] sm:$0xff]
  %v151 = vld [vmem:[%s2 + $0xe8] sm:$0xff]
  %v152 = vld [vmem:[%s2 + $0xf0] sm:$0xff]
  %v153 = vld [vmem:[%s2 + $0xf8] sm:$0xff]
  %154 = vmatprep.subr.mxu0 0.0
  %155 = vmatpush1.msra.mxu0 %v122
  %156 = vmatprep.subr.mxu0 0.0
  %157 = vmatpush1.msra.mxu0 %v123
  %158 = vmatprep.subr.mxu0 0.0
  %159 = vmatpush1.msra.mxu0 %v124
  %160 = vmatprep.subr.mxu0 0.0
  %161 = vmatpush1.msra.mxu0 %v125
  %162 = vmatprep.subr.mxu0 0.0
  %163 = vmatpush1.msra.mxu0 %v126
  %164 = vmatprep.subr.mxu0 0.0
  %165 = vmatpush1.msra.mxu0 %v127
  %166 = vmatprep.subr.mxu0 0.0
  %167 = vmatpush1.msra.mxu0 %v128
  %168 = vmatprep.subr.mxu0 0.0
  %169 = vmatpush1.msra.mxu0 %v129
  %170 = vmatprep.subr.mxu0 0.0
  %171 = vmatpush1.msra.mxu0 %v130
  %172 = vmatprep.subr.mxu0 0.0
  %173 = vmatpush1.msra.mxu0 %v131
  %174 = vmatprep.subr.mxu0 0.0
  %175 = vmatpush1.msra.mxu0 %v132
  %176 = vmatprep.subr.mxu0 0.0
  %177 = vmatpush1.msra.mxu0 %v133
  %178 = vmatprep.subr.mxu0 0.0
  %179 = vmatpush1.msra.mxu0 %v134
  %180 = vmatprep.subr.mxu0 0.0
  %181 = vmatpush1.msra.mxu0 %v135
  %182 = vmatprep.subr.mxu0 0.0
  %183 = vmatpush1.msra.mxu0 %v136
  %184 = vmatprep.subr.mxu0 0.0
  %185 = vmatpush1.msra.mxu0 %v137
  %186 = vmatprep.subr.mxu0 0.0
  %187 = vmatpush1.msra.mxu0 %v138
  %188 = vmatprep.subr.mxu0 0.0
  %189 = vmatpush1.msra.mxu0 %v139
  %190 = vmatprep.subr.mxu0 0.0
  %191 = vmatpush1.msra.mxu0 %v140
  %192 = vmatprep.subr.mxu0 0.0
  %193 = vmatpush1.msra.mxu0 %v141
  %194 = vmatprep.subr.mxu0 0.0
  %195 = vmatpush1.msra.mxu0 %v142
  %196 = vmatprep.subr.mxu0 0.0
  %197 = vmatpush1.msra.mxu0 %v143
  %198 = vmatprep.subr.mxu0 0.0
  %199 = vmatpush1.msra.mxu0 %v144
  %200 = vmatprep.subr.mxu0 0.0
  %201 = vmatpush1.msra.mxu0 %v145
  %202 = vmatprep.subr.mxu0 0.0
  %203 = vmatpush1.msra.mxu0 %v146
  %204 = vmatprep.subr.mxu0 0.0
  %205 = vmatpush1.msra.mxu0 %v147
  %206 = vmatprep.subr.mxu0 0.0
  %207 = vmatpush1.msra.mxu0 %v148
  %208 = vmatprep.subr.mxu0 0.0
  %209 = vmatpush1.msra.mxu0 %v149
  %210 = vmatprep.subr.mxu0 0.0
  %211 = vmatpush1.msra.mxu0 %v150
  %212 = vmatprep.subr.mxu0 0.0
  %213 = vmatpush1.msra.mxu0 %v151
  %214 = vmatprep.subr.mxu0 0.0
  %215 = vmatpush1.msra.mxu0 %v152
  %216 = vmatprep.subr.mxu0 0.0
  %217 = vmatpush1.msra.mxu0 %v153
  %218 = vmatprep.mubr.f32.mxu0 %v121
  %219 = vmatmul.mubr.f32.gmra.mrb[0].mxu0 %v120
  %v220 = vpop.f32.mrb[0].mxu0
  %v221 = vadd.f32 0.0, %v220
  %v222 = vpop.f32.mrb[0].mxu0
  %223 = vdwg.mxu0
  %vm224 = vcmp.gt.f32.partialorder %v221, 20.0
  %v225 = vmin.f32 %v221, 20.0
  %v226 = vmul.f32 %v225, 1.442695
  %v227 = vpow.pop %v226
  %v228 = vadd.f32 %v227, 1.0
  %v229 = vlog2.pop %v228
  %v230 = vmul.f32 %v229, 0.6931472
  %v231 = vsel %vm224, %v221, %v230
  %232 = vst [vmem:[%s3] sm:$0xff] %v231
  %234 = vrot.lane.b32.xlu0 %v231, 8
  %v235 = vpop.permute.xlu0 %234
  %v237 = vadd.f32 %v231, %v235
  %v238 = vmul.f32 %v237, 0.5
  %240 = vrot.lane.b32.xlu0 %v238, 8
  %v241 = vpop.permute.xlu0 %240
  %v243 = vadd.f32 %v231, %v241
  %v244 = vmul.f32 %v243, 0.5
  %246 = vrot.lane.b32.xlu0 %v244, 112
  %v247 = vpop.permute.xlu0 %246
  %vm249 = vcmask 64512
  %250 = vst.msk [vmem:[%s4] sm:$0xff] %vm249, %v247
  // Predicated region
  $region14: #{rcml_forward.1} parent=0 // pred_check
    _
  $region15: #{rcml_forward.1} parent=0 // pred_check_branch
    %252 = sbr.rel (0) target = $region17
  $region16: #{rcml_forward.1} parent=0 // pred_region
    _
  $region17: #{rcml_forward.1} parent=0 // pred_fallthru
    _
  // Predicated region
  $region18: #{rcml_forward.1} parent=0 // pred_check
    _
  $region19: #{rcml_forward.1} parent=0 // pred_check_branch
    %254 = sbr.rel (0) target = $region21
  $region20: #{rcml_forward.1} parent=0 // pred_region
    _
  $region21: #{rcml_forward.1} parent=0 // pred_fallthru
    _
  // Predicated region
  $region22: #{rcml_forward.1} parent=0 // pred_check
    _
  $region23: #{rcml_forward.1} parent=0 // pred_check_branch
    %256 = sbr.rel (0) target = $region25
  $region24: #{rcml_forward.1} parent=0 // pred_region
    _
  $region25: #{rcml_forward.1} parent=0 // pred_fallthru
    _
  // Predicated region
  $region26: #{rcml_forward.1} parent=0 // pred_check
    _
  $region27: #{rcml_forward.1} parent=0 // pred_check_branch
    %258 = sbr.rel (0) target = $region29
  $region28: #{rcml_forward.1} parent=0 // pred_region
    _
  $region29: #{rcml_forward.1} parent=0 // pred_fallthru
    _

</llo_original>
